<compile_context>
chip_gen: v5e
topology: v5e:2x2
jax: 0.10.0
libtpu: 0.0.40
codegen_flags: <defaults>
</compile_context>

<pallas_src>
import jax
import jax.numpy as jnp
from jax.experimental import pallas as pl
from jax.experimental.pallas import tpu as pltpu


def conv1x1_sub_kernel(w_ref, c_ref, x_ref, o_ref):
    # w_ref: (C,)  f32 in SMEM            -- conv weights (out_channels = 1)
    # c_ref: (1,)  f32 in SMEM            -- fused scalar: bias - other
    # x_ref: (bn, C, Sb, L) f32 in VMEM   -- bn batch elements, Sb*L pixels each
    # o_ref: (bn, Sb, L)    f32 in VMEM
    num_ch = x_ref.shape[1]
    # Accumulator initialized with the fused (bias - other) scalar (one broadcast).
    acc = jnp.full(o_ref.shape, c_ref[0], dtype=jnp.float32)
    # C VPU broadcast-FMAs instead of a 1-row MXU dot.
    for ci in range(num_ch):
        acc = acc + w_ref[ci] * x_ref[:, ci, :, :]
    o_ref[...] = acc.astype(o_ref.dtype)


def model_forward(x_nchw, weight, bias, other):
    """x_nchw: (N, C, H, W) f32; weight: (1, C, 1, 1); bias: (1,); other: (1,1,1,1)."""
    N, C, H, W = x_nchw.shape
    P = H * W

    # Free, row-major reshape of the pixel axis; never pad (no extra HBM pass).
    if P % 128 == 0:
        S, L = P // 128, 128
    else:
        # Full-extent last dim waives the (8,128) divisibility rule.
        S, L = 1, P
    x_r = x_nchw.reshape(N, C, S, L).astype(jnp.float32)

    w_s = weight.reshape(C).astype(jnp.float32)
    c_s = (bias.reshape(()) - other.reshape(())).astype(jnp.float32).reshape(1)

    total_bytes = 4 * N * C * S * L
    SMALL_BYTES = 8 << 20
    if L == 128 and total_bytes > SMALL_BYTES:
        # Stream 1024-row pixel tiles per batch element (4 MiB input block,
        # double-buffered -> ~9 MiB VMEM; fits default scoped VMEM everywhere).
        bn, Sb = 1, min(S, 1024)
    elif total_bytes > SMALL_BYTES:
        # Ragged lane dim (H*W not a multiple of 128): one block per batch element.
        # TODO(synk): a single huge non-128-multiple image would need in-kernel
        # lane-tail masking to tile further; not needed at these sizes.
        bn, Sb = 1, S
    else:
        # Whole problem in one sublane/lane-dense slab, single grid step.
        bn, Sb = N, S

    grid = (pl.cdiv(N, bn), pl.cdiv(S, Sb))

    out_flat = pl.pallas_call(
        conv1x1_sub_kernel,
        out_shape=jax.ShapeDtypeStruct((N, S, L), jnp.float32),
        grid=grid,
        in_specs=[
            pl.BlockSpec(memory_space=pltpu.MemorySpace.SMEM),             # weights (C,)
            pl.BlockSpec(memory_space=pltpu.MemorySpace.SMEM),             # bias - other (1,)
            pl.BlockSpec((bn, C, Sb, L), lambda n, p: (n, 0, p, 0)),       # x block
        ],
        out_specs=pl.BlockSpec((bn, Sb, L), lambda n, p: (n, p, 0)),
        compiler_params=pltpu.CompilerParams(
            dimension_semantics=("parallel", "parallel"),
            vmem_limit_bytes=32 * 1024 * 1024),
        cost_estimate=pl.CostEstimate(
            flops=2 * N * C * P,
            transcendentals=0,
            bytes_accessed=4 * (N * C * P + N * P + C + 1)),
    )(w_s, c_s, x_r)

    # (N, S, L) -> (N, 1, H, W); S*L == H*W exactly (no padding was added).
    return out_flat.reshape(N, 1, H, W)


if __name__ == "__main__":
    key = jax.random.PRNGKey(0)
    kx, kw, kb, ko = jax.random.split(key, 4)

    # Shapes consistent with Conv2d(8, 1, kernel_size=1) on 32x32 images.
    N, C, H, W = 2, 8, 32, 32
    x = jax.random.normal(kx, (N, C, H, W), dtype=jnp.float32)
    weight = jax.random.normal(kw, (1, C, 1, 1), dtype=jnp.float32) * 0.1
    bias = jax.random.normal(kb, (1,), dtype=jnp.float32) * 0.1
    other = jax.random.normal(ko, (1, 1, 1, 1), dtype=jnp.float32)

    fwd = jax.jit(model_forward)
    out = jax.block_until_ready(fwd(x, weight, bias, other))

    # Reference (plain JAX): 1x1 conv == channel contraction, then subtract.
    ref = (jnp.einsum("nchw,oc->nohw", x, weight.reshape(1, C))
           + bias.reshape(1, 1, 1, 1) - other)
    assert out.shape == (N, 1, H, W)
    assert jnp.allclose(out, ref, atol=1e-5, rtol=1e-5)

    print("KERNEL_OK")
</pallas_src>

<mosaic_0001>
module attributes {stable_mosaic.version = 11 : i64} {
  func.func @conv1x1_sub_kernel(%arg0: i32, %arg1: i32, %arg2: memref<8xf32, #tpu.memory_space<smem>>, %arg3: memref<1xf32, #tpu.memory_space<smem>>, %arg4: memref<2x8x8x128xf32, #tpu.memory_space<vmem>>, %arg5: memref<2x8x128xf32, #tpu.memory_space<vmem>>) attributes {dimension_semantics = [#tpu.dimension_semantics<parallel>, #tpu.dimension_semantics<parallel>], iteration_bounds = array<i64: 1, 1>, scalar_prefetch = 0 : i64, scratch_operands = 0 : i64, tpu.core_type = #tpu.core_type<tc>, window_params = [{transform_indices = @transform_0, window_bounds = array<i64: 8>}, {transform_indices = @transform_1, window_bounds = array<i64: 1>}, {transform_indices = @transform_2, window_bounds = array<i64: 2, 8, 8, 128>}, {transform_indices = @transform_3, window_bounds = array<i64: 2, 8, 128>}]} {
    %c0 = arith.constant 0 : index
    %0 = memref.load %arg3[%c0] : memref<1xf32, #tpu.memory_space<smem>>
    %1 = vector.broadcast %0 : f32 to vector<2x8x128xf32>
    %c0_0 = arith.constant 0 : index
    %2 = memref.load %arg2[%c0_0] : memref<8xf32, #tpu.memory_space<smem>>
    %c0_1 = arith.constant 0 : index
    %c0_2 = arith.constant 0 : index
    %c0_3 = arith.constant 0 : index
    %c0_4 = arith.constant 0 : index
    %3 = vector.load %arg4[%c0_1, %c0_2, %c0_3, %c0_4] : memref<2x8x8x128xf32, #tpu.memory_space<vmem>>, vector<2x1x8x128xf32>
    %4 = vector.shape_cast %3 : vector<2x1x8x128xf32> to vector<2x8x128xf32>
    %5 = vector.broadcast %2 : f32 to vector<2x8x128xf32>
    %6 = arith.mulf %5, %4 : vector<2x8x128xf32>
    %7 = arith.addf %1, %6 : vector<2x8x128xf32>
    %c1 = arith.constant 1 : index
    %8 = memref.load %arg2[%c1] : memref<8xf32, #tpu.memory_space<smem>>
    %c0_5 = arith.constant 0 : index
    %c1_6 = arith.constant 1 : index
    %c0_7 = arith.constant 0 : index
    %c0_8 = arith.constant 0 : index
    %9 = vector.load %arg4[%c0_5, %c1_6, %c0_7, %c0_8] : memref<2x8x8x128xf32, #tpu.memory_space<vmem>>, vector<2x1x8x128xf32>
    %10 = vector.shape_cast %9 : vector<2x1x8x128xf32> to vector<2x8x128xf32>
    %11 = vector.broadcast %8 : f32 to vector<2x8x128xf32>
    %12 = arith.mulf %11, %10 : vector<2x8x128xf32>
    %13 = arith.addf %7, %12 : vector<2x8x128xf32>
    %c2 = arith.constant 2 : index
    %14 = memref.load %arg2[%c2] : memref<8xf32, #tpu.memory_space<smem>>
    %c0_9 = arith.constant 0 : index
    %c2_10 = arith.constant 2 : index
    %c0_11 = arith.constant 0 : index
    %c0_12 = arith.constant 0 : index
    %15 = vector.load %arg4[%c0_9, %c2_10, %c0_11, %c0_12] : memref<2x8x8x128xf32, #tpu.memory_space<vmem>>, vector<2x1x8x128xf32>
    %16 = vector.shape_cast %15 : vector<2x1x8x128xf32> to vector<2x8x128xf32>
    %17 = vector.broadcast %14 : f32 to vector<2x8x128xf32>
    %18 = arith.mulf %17, %16 : vector<2x8x128xf32>
    %19 = arith.addf %13, %18 : vector<2x8x128xf32>
    %c3 = arith.constant 3 : index
    %20 = memref.load %arg2[%c3] : memref<8xf32, #tpu.memory_space<smem>>
    %c0_13 = arith.constant 0 : index
    %c3_14 = arith.constant 3 : index
    %c0_15 = arith.constant 0 : index
    %c0_16 = arith.constant 0 : index
    %21 = vector.load %arg4[%c0_13, %c3_14, %c0_15, %c0_16] : memref<2x8x8x128xf32, #tpu.memory_space<vmem>>, vector<2x1x8x128xf32>
    %22 = vector.shape_cast %21 : vector<2x1x8x128xf32> to vector<2x8x128xf32>
    %23 = vector.broadcast %20 : f32 to vector<2x8x128xf32>
    %24 = arith.mulf %23, %22 : vector<2x8x128xf32>
    %25 = arith.addf %19, %24 : vector<2x8x128xf32>
    %c4 = arith.constant 4 : index
    %26 = memref.load %arg2[%c4] : memref<8xf32, #tpu.memory_space<smem>>
    %c0_17 = arith.constant 0 : index
    %c4_18 = arith.constant 4 : index
    %c0_19 = arith.constant 0 : index
    %c0_20 = arith.constant 0 : index
    %27 = vector.load %arg4[%c0_17, %c4_18, %c0_19, %c0_20] : memref<2x8x8x128xf32, #tpu.memory_space<vmem>>, vector<2x1x8x128xf32>
    %28 = vector.shape_cast %27 : vector<2x1x8x128xf32> to vector<2x8x128xf32>
    %29 = vector.broadcast %26 : f32 to vector<2x8x128xf32>
    %30 = arith.mulf %29, %28 : vector<2x8x128xf32>
    %31 = arith.addf %25, %30 : vector<2x8x128xf32>
    %c5 = arith.constant 5 : index
    %32 = memref.load %arg2[%c5] : memref<8xf32, #tpu.memory_space<smem>>
    %c0_21 = arith.constant 0 : index
    %c5_22 = arith.constant 5 : index
    %c0_23 = arith.constant 0 : index
    %c0_24 = arith.constant 0 : index
    %33 = vector.load %arg4[%c0_21, %c5_22, %c0_23, %c0_24] : memref<2x8x8x128xf32, #tpu.memory_space<vmem>>, vector<2x1x8x128xf32>
    %34 = vector.shape_cast %33 : vector<2x1x8x128xf32> to vector<2x8x128xf32>
    %35 = vector.broadcast %32 : f32 to vector<2x8x128xf32>
    %36 = arith.mulf %35, %34 : vector<2x8x128xf32>
    %37 = arith.addf %31, %36 : vector<2x8x128xf32>
    %c6 = arith.constant 6 : index
    %38 = memref.load %arg2[%c6] : memref<8xf32, #tpu.memory_space<smem>>
    %c0_25 = arith.constant 0 : index
    %c6_26 = arith.constant 6 : index
    %c0_27 = arith.constant 0 : index
    %c0_28 = arith.constant 0 : index
    %39 = vector.load %arg4[%c0_25, %c6_26, %c0_27, %c0_28] : memref<2x8x8x128xf32, #tpu.memory_space<vmem>>, vector<2x1x8x128xf32>
    %40 = vector.shape_cast %39 : vector<2x1x8x128xf32> to vector<2x8x128xf32>
    %41 = vector.broadcast %38 : f32 to vector<2x8x128xf32>
    %42 = arith.mulf %41, %40 : vector<2x8x128xf32>
    %43 = arith.addf %37, %42 : vector<2x8x128xf32>
    %c7 = arith.constant 7 : index
    %44 = memref.load %arg2[%c7] : memref<8xf32, #tpu.memory_space<smem>>
    %c0_29 = arith.constant 0 : index
    %c7_30 = arith.constant 7 : index
    %c0_31 = arith.constant 0 : index
    %c0_32 = arith.constant 0 : index
    %45 = vector.load %arg4[%c0_29, %c7_30, %c0_31, %c0_32] : memref<2x8x8x128xf32, #tpu.memory_space<vmem>>, vector<2x1x8x128xf32>
    %46 = vector.shape_cast %45 : vector<2x1x8x128xf32> to vector<2x8x128xf32>
    %47 = vector.broadcast %44 : f32 to vector<2x8x128xf32>
    %48 = arith.mulf %47, %46 : vector<2x8x128xf32>
    %49 = arith.addf %43, %48 : vector<2x8x128xf32>
    %c0_33 = arith.constant 0 : index
    %c0_34 = arith.constant 0 : index
    %c0_35 = arith.constant 0 : index
    %50 = vector.load %arg5[%c0_33, %c0_34, %c0_35] : memref<2x8x128xf32, #tpu.memory_space<vmem>>, vector<2x8x128xf32>
    tpu.vector_store %arg5[%c0_33, %c0_34, %c0_35], %49 {strides = array<i32>} : memref<2x8x128xf32, #tpu.memory_space<vmem>>, vector<2x8x128xf32>,
    return
  }
  func.func @transform_0(%arg0: i32, %arg1: i32) -> i32 {
    %c0_i32 = arith.constant 0 : i32
    %c0_i32_0 = arith.constant 0 : i32
    return %c0_i32 : i32
  }
  func.func @transform_1(%arg0: i32, %arg1: i32) -> i32 {
    %c0_i32 = arith.constant 0 : i32
    %c0_i32_0 = arith.constant 0 : i32
    return %c0_i32 : i32
  }
  func.func @transform_2(%arg0: i32, %arg1: i32) -> (i32, i32, i32, i32) {
    %c0_i32 = arith.constant 0 : i32
    %c0_i32_0 = arith.constant 0 : i32
    %c0_i32_1 = arith.constant 0 : i32
    return %arg0, %c0_i32, %arg1, %c0_i32_0 : i32, i32, i32, i32
  }
  func.func @transform_3(%arg0: i32, %arg1: i32) -> (i32, i32, i32) {
    %c0_i32 = arith.constant 0 : i32
    %c0_i32_0 = arith.constant 0 : i32
    return %arg0, %arg1, %c0_i32 : i32, i32, i32
  }
}

</mosaic_0001>

<llo_original>
// kernel: model_forward.1
$region0: #{model_forward.1}
  #allocation0 [shape = 'u32[]', space=smem, size = 0x4, offset = 0x4, fixed_abs, tag = 'smem constant byte address 0x4 - core index']
  #allocation1 [shape = 'u32[72,128]{1,0:T(1,128)}', space=vmem, size = 0x9000, scoped, tag = 'internal scratch']
  #allocation2 [shape = 'f32[1]{0:T(128)S(6)}', space=smem, size = 0x200, scoped, tag = 'scoped memory for model_forward.1']
  %s0 = inlined_call_operand.vmem [shape: f32[8], index: 0, kind: input, shape index: {}]
  %s1 = inlined_call_operand.<no memory space> [shape: f32[1], index: 1, kind: input, shape index: {}]
  %s2 = inlined_call_operand.vmem [shape: f32[2,8,8,128], index: 2, kind: input, shape index: {}]
  %s3 = inlined_call_operand.vmem [shape: f32[2,8,128], index: 3, kind: output, shape index: {}]
  %s4 = sld [smem:[#allocation0]]
  $region26: #{model_forward.1} parent=0
    _
  %s6 = ssub.s32 1, %s4
  %s7 = scalar_select 0, %s6, %s4
  %8 = sst [smem:[#allocation2]] %s1
  $region1: #{model_forward.1} parent=0
    #allocation3 [shape = 'u8[512]{0}', space=smem, size = 0x200, scoped, tag = 'input window, operand 0, single buffered']
    #allocation4 [shape = 's32[1]{0}', space=sflag, size = 0x4, scoped, tag = 'scoped memory for model_forward.1']
    %9 = vsyncpa [#allocation4], 0
    // Predicated region
    $region2: #{model_forward.1} parent=1 // pred_check
      _
    $region3: #{model_forward.1} parent=1 // pred_check_branch
      %11 = sbr.rel (0) target = $region5
    $region4: #{model_forward.1} parent=1 // pred_region
      %13 = vsyncadd [#allocation4], 0
      %s15 = sshll.u32 %s0, 4
      %s16 = int_to_ptr.vmem [resolvable:$true] %s15
      %18 = dma.vmem_to_smem %s16, 16, [#allocation3], [#allocation4]
    $region5: #{model_forward.1} parent=1 // pred_fallthru
      _
    // Predicated region
    $region6: #{model_forward.1} parent=1 // pred_check
      _
    $region7: #{model_forward.1} parent=1 // pred_check_branch
      %20 = sbr.rel (0) target = $region9
    $region8: #{model_forward.1} parent=1 // pred_region
      _
    $region9: #{model_forward.1} parent=1 // pred_fallthru
      _
    // Predicated region
    $region10: #{model_forward.1} parent=1 // pred_check
      _
    $region11: #{model_forward.1} parent=1 // pred_check_branch
      %22 = sbr.rel (0) target = $region13
    $region12: #{model_forward.1} parent=1 // pred_region
      _
    $region13: #{model_forward.1} parent=1 // pred_fallthru
      _
    // Predicated region
    $region14: #{model_forward.1} parent=1 // pred_check
      _
    $region15: #{model_forward.1} parent=1 // pred_check_branch
      %24 = sbr.rel (0) target = $region17
    $region16: #{model_forward.1} parent=1 // pred_region
      %26 = dma.done [#allocation4], 16
    $region17: #{model_forward.1} parent=1 // pred_fallthru
      _
    %27 = sfence
    %s28 = sld [smem:[#allocation2]]
    %v29 = vstv %s28
    %s30 = sld [smem:[#allocation3]]
    %v31 = vld [vmem:[%s2] sm:$0xff]
    %v32 = vld [vmem:[%s2 + $0x40] sm:$0xff]
    %v33 = vstv %s30
    %v34 = vmul.f32 %v33, %v31
    %v35 = vmul.f32 %v33, %v32
    %v36 = vadd.f32 %v29, %v34
    %v37 = vadd.f32 %v29, %v35
    %s38 = sld [smem:[#allocation3 + $0x1]]
    %s39 = scalar_lea.vmem %s2, 8
    %v40 = vld [vmem:[%s39] sm:$0xff]
    %v41 = vld [vmem:[%s39 + $0x40] sm:$0xff]
    %v42 = vstv %s38
    %v43 = vmul.f32 %v42, %v40
    %v44 = vmul.f32 %v42, %v41
    %v45 = vadd.f32 %v36, %v43
    %v46 = vadd.f32 %v37, %v44
    %s47 = sld [smem:[#allocation3 + $0x2]]
    %s48 = scalar_lea.vmem %s2, 16
    %v49 = vld [vmem:[%s48] sm:$0xff]
    %v50 = vld [vmem:[%s48 + $0x40] sm:$0xff]
    %v51 = vstv %s47
    %v52 = vmul.f32 %v51, %v49
    %v53 = vmul.f32 %v51, %v50
    %v54 = vadd.f32 %v45, %v52
    %v55 = vadd.f32 %v46, %v53
    %s56 = sld [smem:[#allocation3 + $0x3]]
    %s57 = scalar_lea.vmem %s2, 24
    %v58 = vld [vmem:[%s57] sm:$0xff]
    %v59 = vld [vmem:[%s57 + $0x40] sm:$0xff]
    %v60 = vstv %s56
    %v61 = vmul.f32 %v60, %v58
    %v62 = vmul.f32 %v60, %v59
    %v63 = vadd.f32 %v54, %v61
    %v64 = vadd.f32 %v55, %v62
    %s65 = sld [smem:[#allocation3 + $0x4]]
    %s66 = scalar_lea.vmem %s2, 32
    %v67 = vld [vmem:[%s66] sm:$0xff]
    %v68 = vld [vmem:[%s66 + $0x40] sm:$0xff]
    %v69 = vstv %s65
    %v70 = vmul.f32 %v69, %v67
    %v71 = vmul.f32 %v69, %v68
    %v72 = vadd.f32 %v63, %v70
    %v73 = vadd.f32 %v64, %v71
    %s74 = sld [smem:[#allocation3 + $0x5]]
    %s75 = scalar_lea.vmem %s2, 40
    %v76 = vld [vmem:[%s75] sm:$0xff]
    %v77 = vld [vmem:[%s75 + $0x40] sm:$0xff]
    %v78 = vstv %s74
    %v79 = vmul.f32 %v78, %v76
    %v80 = vmul.f32 %v78, %v77
    %v81 = vadd.f32 %v72, %v79
    %v82 = vadd.f32 %v73, %v80
    %s83 = sld [smem:[#allocation3 + $0x6]]
    %s84 = scalar_lea.vmem %s2, 48
    %v85 = vld [vmem:[%s84] sm:$0xff]
    %v86 = vld [vmem:[%s84 + $0x40] sm:$0xff]
    %v87 = vstv %s83
    %v88 = vmul.f32 %v87, %v85
    %v89 = vmul.f32 %v87, %v86
    %v90 = vadd.f32 %v81, %v88
    %v91 = vadd.f32 %v82, %v89
    %s92 = sld [smem:[#allocation3 + $0x7]]
    %s93 = scalar_lea.vmem %s2, 56
    %v94 = vld [vmem:[%s93] sm:$0xff]
    %v95 = vld [vmem:[%s93 + $0x40] sm:$0xff]
    %v96 = vstv %s92
    %v97 = vmul.f32 %v96, %v94
    %v98 = vmul.f32 %v96, %v95
    %v99 = vadd.f32 %v90, %v97
    %v100 = vadd.f32 %v91, %v98
    %101 = vst [vmem:[%s3] sm:$0xff] %v99
    %102 = vst [vmem:[%s3 + $0x8] sm:$0xff] %v100
    // Predicated region
    $region18: #{model_forward.1} parent=1 // pred_check
      _
    $region19: #{model_forward.1} parent=1 // pred_check_branch
      %104 = sbr.rel (0) target = $region21
    $region20: #{model_forward.1} parent=1 // pred_region
      _
    $region21: #{model_forward.1} parent=1 // pred_fallthru
      _
    // Predicated region
    $region22: #{model_forward.1} parent=1 // pred_check
      _
    $region23: #{model_forward.1} parent=1 // pred_check_branch
      %106 = sbr.rel (0) target = $region25
    $region24: #{model_forward.1} parent=1 // pred_region
      _
    $region25: #{model_forward.1} parent=1 // pred_fallthru
      _
    %107 = vsyncpa [#allocation4], 1

</llo_original>
